<compile_context>
chip_gen: v7x
topology: tpu7x:2x2x1
jax: 0.10.0
libtpu: 0.0.40
codegen_flags: <defaults>
</compile_context>

<pallas_src>
import functools

import jax
import jax.numpy as jnp
from jax import lax
from jax.experimental import pallas as pl
from jax.experimental.pallas import tpu as pltpu

NEG_SLOPE = 0.01
BN_EPS = 1e-5


def _leaky(x):
    return jnp.where(x >= 0, x, NEG_SLOPE * x)


def _make_kernel(TILE_H, Wo, Cin, Cout, stride):
    def kernel(x_ref, dw_ref, b1_ref, pw_ref, b2_ref, o_ref):
        # x_ref : (1, Hp, Wp, Cin)  padded image of one batch elem (resident across row tiles)
        # dw_ref: (3, 3, Cin)       depthwise weights, BN1 scale folded in (f32)
        # b1_ref: (1, Cin)          folded BN1 bias
        # pw_ref: (Cin, Cout)       pointwise weights, BN2 scale folded in (bf16)
        # b2_ref: (1, Cout)         folded BN2 bias
        # o_ref : (1, TILE_H, Wo, Cout)
        r = pl.program_id(1)
        row0 = r * (TILE_H * stride)  # first padded-input row for this output row tile

        dw = dw_ref[...]  # tiny (3,3,Cin), loaded once

        # 3x3 depthwise conv as 9 shifted multiply-accumulates on the VPU.
        # Accumulator starts from the folded BN1 bias (no separate scale/bias pass).
        acc = jnp.broadcast_to(b1_ref[...].astype(jnp.float32), (TILE_H, Wo, Cin))
        for dy in range(3):
            for dx in range(3):
                if stride == 1:
                    patch = x_ref[0, pl.ds(row0 + dy, TILE_H), pl.ds(dx, Wo), :]
                else:
                    # TODO(synk): stride>1 uses a sublane-strided ref load; restructure
                    # into dense even/odd column windows if stride-2 layers become hot.
                    patch = x_ref[0,
                                  pl.ds(row0 + dy, TILE_H, stride=stride),
                                  pl.ds(dx, Wo, stride=stride), :]
                acc = acc + patch.astype(jnp.float32) * dw[dy, dx, :]

        y1 = _leaky(acc)  # BN1 already folded into weights/bias

        # 1x1 pointwise conv on the MXU: bf16 operands, f32 accumulation.
        y1_bf = y1.reshape(TILE_H * Wo, Cin).astype(jnp.bfloat16)
        y2 = jnp.dot(y1_bf, pw_ref[...], preferred_element_type=jnp.float32)
        y2 = _leaky(y2 + b2_ref[...])  # BN2 already folded into weights/bias

        o_ref[0] = y2.reshape(TILE_H, Wo, Cout).astype(o_ref.dtype)

    return kernel


@functools.partial(jax.jit, static_argnames=("stride",))
def conv_dw_forward(x_nchw, params, stride=1):
    """Forward pass of conv_dw. x_nchw: (N, Cin, H, W) float32 -> (N, Cout, Ho, Wo)."""
    dw_w, g1, b1, m1, v1, pw_w, g2, b2, m2, v2 = params
    N, Cin, H, W = x_nchw.shape
    Cout = pw_w.shape[1]

    # Fold eval-mode BN into the conv weights (scales) + per-channel biases.
    s1 = g1 * lax.rsqrt(v1 + BN_EPS)
    bb1 = b1 - m1 * s1
    s2 = g2 * lax.rsqrt(v2 + BN_EPS)
    bb2 = b2 - m2 * s2
    dw_f = (dw_w * s1).astype(jnp.float32)                # (3, 3, Cin)
    pw_f = (pw_w * s2[None, :]).astype(jnp.bfloat16)      # (Cin, Cout), bf16 for MXU

    Ho = (H - 1) // stride + 1
    Wo = (W - 1) // stride + 1

    # Row tiling of the output (second grid axis): bounds per-step VMEM
    # intermediates and adds pipeline depth / a second parallel grid axis.
    TILE_H = min(8, Ho)
    n_r = pl.cdiv(Ho, TILE_H)
    Ho_p = n_r * TILE_H

    # NCHW -> NHWC; spatial halo pad (=1) plus extra bottom rows so row tiles
    # divide evenly (the padded output rows are sliced off below).
    # TODO(synk): the 1-pixel halo could be handled in-kernel to avoid this HBM repack.
    Hp_req = (Ho_p - 1) * stride + 3
    pad_bot = 1 + max(0, Hp_req - (H + 2))
    x_nhwc = jnp.transpose(x_nchw, (0, 2, 3, 1))
    x_pad = jnp.pad(x_nhwc, ((0, 0), (1, pad_bot), (1, 1), (0, 0)))
    Hp, Wp = H + 1 + pad_bot, W + 2

    kernel = _make_kernel(TILE_H, Wo, Cin, Cout, stride)

    out_nhwc = pl.pallas_call(
        kernel,
        out_shape=jax.ShapeDtypeStruct((N, Ho_p, Wo, Cout), x_nchw.dtype),
        grid=(N, n_r),
        in_specs=[
            pl.BlockSpec((1, Hp, Wp, Cin), lambda n, r: (n, 0, 0, 0)),
            pl.BlockSpec((3, 3, Cin), lambda n, r: (0, 0, 0)),
            pl.BlockSpec((1, Cin), lambda n, r: (0, 0)),
            pl.BlockSpec((Cin, Cout), lambda n, r: (0, 0)),
            pl.BlockSpec((1, Cout), lambda n, r: (0, 0)),
        ],
        out_specs=pl.BlockSpec((1, TILE_H, Wo, Cout), lambda n, r: (n, r, 0, 0)),
        compiler_params=pltpu.CompilerParams(
            dimension_semantics=("parallel", "parallel"),
            vmem_limit_bytes=32 * 1024 * 1024,
        ),
    )(
        x_pad,
        dw_f,
        bb1.reshape(1, Cin).astype(jnp.float32),
        pw_f,
        bb2.reshape(1, Cout).astype(jnp.float32),
    )

    out_nhwc = out_nhwc[:, :Ho]
    return jnp.transpose(out_nhwc, (0, 3, 1, 2))  # back to NCHW


def reference_forward(x_nchw, params, stride=1):
    """Pure-JAX f32 reference with the same (eval-mode BN) semantics."""
    dw_w, g1, b1, m1, v1, pw_w, g2, b2, m2, v2 = params
    Cin = x_nchw.shape[1]
    x = jnp.transpose(x_nchw, (0, 2, 3, 1))                      # NHWC
    dw_hwio = dw_w[:, :, None, :]                                # (3,3,1,Cin)
    y = lax.conv_general_dilated(
        x, dw_hwio, window_strides=(stride, stride),
        padding=((1, 1), (1, 1)),
        dimension_numbers=("NHWC", "HWIO", "NHWC"),
        feature_group_count=Cin)
    y = (y - m1) / jnp.sqrt(v1 + BN_EPS) * g1 + b1
    y = _leaky(y)
    y = jnp.einsum("nhwc,co->nhwo", y, pw_w)
    y = (y - m2) / jnp.sqrt(v2 + BN_EPS) * g2 + b2
    y = _leaky(y)
    return jnp.transpose(y, (0, 3, 1, 2))                        # NCHW


def init_params(key, inp, oup):
    ks = jax.random.split(key, 10)
    # Depthwise weight (torch shape (inp,1,3,3)) stored as (3, 3, inp).
    dw_w = 0.1 * jax.random.normal(ks[0], (3, 3, inp), jnp.float32)
    # Pointwise weight (torch shape (oup,inp,1,1)) stored as (inp, oup).
    pw_w = 0.1 * jax.random.normal(ks[1], (inp, oup), jnp.float32)
    g1 = 1.0 + 0.1 * jax.random.normal(ks[2], (inp,), jnp.float32)
    b1 = 0.1 * jax.random.normal(ks[3], (inp,), jnp.float32)
    m1 = 0.05 * jax.random.normal(ks[4], (inp,), jnp.float32)
    v1 = jax.random.uniform(ks[5], (inp,), jnp.float32, 0.5, 1.5)
    g2 = 1.0 + 0.1 * jax.random.normal(ks[6], (oup,), jnp.float32)
    b2 = 0.1 * jax.random.normal(ks[7], (oup,), jnp.float32)
    m2 = 0.05 * jax.random.normal(ks[8], (oup,), jnp.float32)
    v2 = jax.random.uniform(ks[9], (oup,), jnp.float32, 0.5, 1.5)
    return (dw_w, g1, b1, m1, v1, pw_w, g2, b2, m2, v2)


if __name__ == "__main__":
    key = jax.random.PRNGKey(0)
    k_x, k_p = jax.random.split(key)

    N, INP, OUP, H, W = 2, 4, 8, 16, 16
    STRIDE = 1

    x = jax.random.normal(k_x, (N, INP, H, W), jnp.float32)
    params = init_params(k_p, INP, OUP)

    out = conv_dw_forward(x, params, stride=STRIDE)
    out = jax.block_until_ready(out)

    ref = reference_forward(x, params, stride=STRIDE)
    assert out.shape == ref.shape, (out.shape, ref.shape)
    # bf16 MXU pointwise path -> relaxed tolerance vs. the f32 reference.
    assert jnp.allclose(out, ref, rtol=1e-2, atol=1e-2), float(jnp.abs(out - ref).max())

    print("KERNEL_OK")
</pallas_src>

<mosaic_0001>
module attributes {stable_mosaic.version = 11 : i64} {
  func.func @kernel(%arg0: i32, %arg1: i32, %arg2: memref<1x18x18x4xf32, #tpu.memory_space<vmem>>, %arg3: memref<3x3x4xf32, #tpu.memory_space<vmem>>, %arg4: memref<1x4xf32, #tpu.memory_space<vmem>>, %arg5: memref<4x8xbf16, #tpu.memory_space<vmem>>, %arg6: memref<1x8xf32, #tpu.memory_space<vmem>>, %arg7: memref<1x8x16x8xf32, #tpu.memory_space<vmem>>) attributes {dimension_semantics = [#tpu.dimension_semantics<parallel>, #tpu.dimension_semantics<parallel>], iteration_bounds = array<i64: 2, 2>, scalar_prefetch = 0 : i64, scratch_operands = 0 : i64, tpu.core_type = #tpu.core_type<tc>, window_params = [{transform_indices = @transform_0, window_bounds = array<i64: 1, 18, 18, 4>}, {pipeline_mode = #tpu.pipeline_mode<synchronous>, transform_indices = @transform_1, window_bounds = array<i64: 3, 3, 4>}, {pipeline_mode = #tpu.pipeline_mode<synchronous>, transform_indices = @transform_2, window_bounds = array<i64: 1, 4>}, {pipeline_mode = #tpu.pipeline_mode<synchronous>, transform_indices = @transform_3, window_bounds = array<i64: 4, 8>}, {pipeline_mode = #tpu.pipeline_mode<synchronous>, transform_indices = @transform_4, window_bounds = array<i64: 1, 8>}, {transform_indices = @transform_5, window_bounds = array<i64: 1, 8, 16, 8>}]} {
    %c8_i32 = arith.constant 8 : i32
    %0 = arith.muli %arg1, %c8_i32 : i32
    %c0 = arith.constant 0 : index
    %c0_0 = arith.constant 0 : index
    %c0_1 = arith.constant 0 : index
    %1 = vector.load %arg3[%c0, %c0_0, %c0_1] : memref<3x3x4xf32, #tpu.memory_space<vmem>>, vector<3x3x4xf32>
    %c0_2 = arith.constant 0 : index
    %c0_3 = arith.constant 0 : index
    %2 = vector.load %arg4[%c0_2, %c0_3] : memref<1x4xf32, #tpu.memory_space<vmem>>, vector<1x4xf32>
    %3 = vector.shape_cast %2 : vector<1x4xf32> to vector<1x1x4xf32>
    %4 = vector.broadcast %3 : vector<1x1x4xf32> to vector<8x16x4xf32>
    %c0_i32 = arith.constant 0 : i32
    %5 = arith.addi %0, %c0_i32 : i32
    %c0_4 = arith.constant 0 : index
    %6 = arith.index_cast %5 : i32 to index
    %c0_5 = arith.constant 0 : index
    %c0_6 = arith.constant 0 : index
    %7 = vector.load %arg2[%c0_4, %6, %c0_5, %c0_6] : memref<1x18x18x4xf32, #tpu.memory_space<vmem>>, vector<1x8x16x4xf32>
    %8 = vector.shape_cast %7 : vector<1x8x16x4xf32> to vector<8x16x4xf32>
    %9 = vector.extract_strided_slice %1 {offsets = [0, 0, 0], sizes = [1, 1, 4], strides = [1, 1, 1]} : vector<3x3x4xf32> to vector<1x1x4xf32>
    %10 = vector.shape_cast %9 : vector<1x1x4xf32> to vector<4xf32>
    %11 = vector.shape_cast %10 : vector<4xf32> to vector<1x1x4xf32>
    %12 = vector.broadcast %11 : vector<1x1x4xf32> to vector<8x16x4xf32>
    %13 = arith.mulf %8, %12 : vector<8x16x4xf32>
    %14 = arith.addf %4, %13 : vector<8x16x4xf32>
    %c0_i32_7 = arith.constant 0 : i32
    %15 = arith.addi %0, %c0_i32_7 : i32
    %c0_8 = arith.constant 0 : index
    %16 = arith.index_cast %15 : i32 to index
    %c1 = arith.constant 1 : index
    %c0_9 = arith.constant 0 : index
    %17 = vector.load %arg2[%c0_8, %16, %c1, %c0_9] : memref<1x18x18x4xf32, #tpu.memory_space<vmem>>, vector<1x8x16x4xf32>
    %18 = vector.shape_cast %17 : vector<1x8x16x4xf32> to vector<8x16x4xf32>
    %19 = vector.extract_strided_slice %1 {offsets = [0, 1, 0], sizes = [1, 1, 4], strides = [1, 1, 1]} : vector<3x3x4xf32> to vector<1x1x4xf32>
    %20 = vector.shape_cast %19 : vector<1x1x4xf32> to vector<4xf32>
    %21 = vector.shape_cast %20 : vector<4xf32> to vector<1x1x4xf32>
    %22 = vector.broadcast %21 : vector<1x1x4xf32> to vector<8x16x4xf32>
    %23 = arith.mulf %18, %22 : vector<8x16x4xf32>
    %24 = arith.addf %14, %23 : vector<8x16x4xf32>
    %c0_i32_10 = arith.constant 0 : i32
    %25 = arith.addi %0, %c0_i32_10 : i32
    %c0_11 = arith.constant 0 : index
    %26 = arith.index_cast %25 : i32 to index
    %c2 = arith.constant 2 : index
    %c0_12 = arith.constant 0 : index
    %27 = vector.load %arg2[%c0_11, %26, %c2, %c0_12] : memref<1x18x18x4xf32, #tpu.memory_space<vmem>>, vector<1x8x16x4xf32>
    %28 = vector.shape_cast %27 : vector<1x8x16x4xf32> to vector<8x16x4xf32>
    %29 = vector.extract_strided_slice %1 {offsets = [0, 2, 0], sizes = [1, 1, 4], strides = [1, 1, 1]} : vector<3x3x4xf32> to vector<1x1x4xf32>
    %30 = vector.shape_cast %29 : vector<1x1x4xf32> to vector<4xf32>
    %31 = vector.shape_cast %30 : vector<4xf32> to vector<1x1x4xf32>
    %32 = vector.broadcast %31 : vector<1x1x4xf32> to vector<8x16x4xf32>
    %33 = arith.mulf %28, %32 : vector<8x16x4xf32>
    %34 = arith.addf %24, %33 : vector<8x16x4xf32>
    %c1_i32 = arith.constant 1 : i32
    %35 = arith.addi %0, %c1_i32 : i32
    %c0_13 = arith.constant 0 : index
    %36 = arith.index_cast %35 : i32 to index
    %c0_14 = arith.constant 0 : index
    %c0_15 = arith.constant 0 : index
    %37 = vector.load %arg2[%c0_13, %36, %c0_14, %c0_15] : memref<1x18x18x4xf32, #tpu.memory_space<vmem>>, vector<1x8x16x4xf32>
    %38 = vector.shape_cast %37 : vector<1x8x16x4xf32> to vector<8x16x4xf32>
    %39 = vector.extract_strided_slice %1 {offsets = [1, 0, 0], sizes = [1, 1, 4], strides = [1, 1, 1]} : vector<3x3x4xf32> to vector<1x1x4xf32>
    %40 = vector.shape_cast %39 : vector<1x1x4xf32> to vector<4xf32>
    %41 = vector.shape_cast %40 : vector<4xf32> to vector<1x1x4xf32>
    %42 = vector.broadcast %41 : vector<1x1x4xf32> to vector<8x16x4xf32>
    %43 = arith.mulf %38, %42 : vector<8x16x4xf32>
    %44 = arith.addf %34, %43 : vector<8x16x4xf32>
    %c1_i32_16 = arith.constant 1 : i32
    %45 = arith.addi %0, %c1_i32_16 : i32
    %c0_17 = arith.constant 0 : index
    %46 = arith.index_cast %45 : i32 to index
    %c1_18 = arith.constant 1 : index
    %c0_19 = arith.constant 0 : index
    %47 = vector.load %arg2[%c0_17, %46, %c1_18, %c0_19] : memref<1x18x18x4xf32, #tpu.memory_space<vmem>>, vector<1x8x16x4xf32>
    %48 = vector.shape_cast %47 : vector<1x8x16x4xf32> to vector<8x16x4xf32>
    %49 = vector.extract_strided_slice %1 {offsets = [1, 1, 0], sizes = [1, 1, 4], strides = [1, 1, 1]} : vector<3x3x4xf32> to vector<1x1x4xf32>
    %50 = vector.shape_cast %49 : vector<1x1x4xf32> to vector<4xf32>
    %51 = vector.shape_cast %50 : vector<4xf32> to vector<1x1x4xf32>
    %52 = vector.broadcast %51 : vector<1x1x4xf32> to vector<8x16x4xf32>
    %53 = arith.mulf %48, %52 : vector<8x16x4xf32>
    %54 = arith.addf %44, %53 : vector<8x16x4xf32>
    %c1_i32_20 = arith.constant 1 : i32
    %55 = arith.addi %0, %c1_i32_20 : i32
    %c0_21 = arith.constant 0 : index
    %56 = arith.index_cast %55 : i32 to index
    %c2_22 = arith.constant 2 : index
    %c0_23 = arith.constant 0 : index
    %57 = vector.load %arg2[%c0_21, %56, %c2_22, %c0_23] : memref<1x18x18x4xf32, #tpu.memory_space<vmem>>, vector<1x8x16x4xf32>
    %58 = vector.shape_cast %57 : vector<1x8x16x4xf32> to vector<8x16x4xf32>
    %59 = vector.extract_strided_slice %1 {offsets = [1, 2, 0], sizes = [1, 1, 4], strides = [1, 1, 1]} : vector<3x3x4xf32> to vector<1x1x4xf32>
    %60 = vector.shape_cast %59 : vector<1x1x4xf32> to vector<4xf32>
    %61 = vector.shape_cast %60 : vector<4xf32> to vector<1x1x4xf32>
    %62 = vector.broadcast %61 : vector<1x1x4xf32> to vector<8x16x4xf32>
    %63 = arith.mulf %58, %62 : vector<8x16x4xf32>
    %64 = arith.addf %54, %63 : vector<8x16x4xf32>
    %c2_i32 = arith.constant 2 : i32
    %65 = arith.addi %0, %c2_i32 : i32
    %c0_24 = arith.constant 0 : index
    %66 = arith.index_cast %65 : i32 to index
    %c0_25 = arith.constant 0 : index
    %c0_26 = arith.constant 0 : index
    %67 = vector.load %arg2[%c0_24, %66, %c0_25, %c0_26] : memref<1x18x18x4xf32, #tpu.memory_space<vmem>>, vector<1x8x16x4xf32>
    %68 = vector.shape_cast %67 : vector<1x8x16x4xf32> to vector<8x16x4xf32>
    %69 = vector.extract_strided_slice %1 {offsets = [2, 0, 0], sizes = [1, 1, 4], strides = [1, 1, 1]} : vector<3x3x4xf32> to vector<1x1x4xf32>
    %70 = vector.shape_cast %69 : vector<1x1x4xf32> to vector<4xf32>
    %71 = vector.shape_cast %70 : vector<4xf32> to vector<1x1x4xf32>
    %72 = vector.broadcast %71 : vector<1x1x4xf32> to vector<8x16x4xf32>
    %73 = arith.mulf %68, %72 : vector<8x16x4xf32>
    %74 = arith.addf %64, %73 : vector<8x16x4xf32>
    %c2_i32_27 = arith.constant 2 : i32
    %75 = arith.addi %0, %c2_i32_27 : i32
    %c0_28 = arith.constant 0 : index
    %76 = arith.index_cast %75 : i32 to index
    %c1_29 = arith.constant 1 : index
    %c0_30 = arith.constant 0 : index
    %77 = vector.load %arg2[%c0_28, %76, %c1_29, %c0_30] : memref<1x18x18x4xf32, #tpu.memory_space<vmem>>, vector<1x8x16x4xf32>
    %78 = vector.shape_cast %77 : vector<1x8x16x4xf32> to vector<8x16x4xf32>
    %79 = vector.extract_strided_slice %1 {offsets = [2, 1, 0], sizes = [1, 1, 4], strides = [1, 1, 1]} : vector<3x3x4xf32> to vector<1x1x4xf32>
    %80 = vector.shape_cast %79 : vector<1x1x4xf32> to vector<4xf32>
    %81 = vector.shape_cast %80 : vector<4xf32> to vector<1x1x4xf32>
    %82 = vector.broadcast %81 : vector<1x1x4xf32> to vector<8x16x4xf32>
    %83 = arith.mulf %78, %82 : vector<8x16x4xf32>
    %84 = arith.addf %74, %83 : vector<8x16x4xf32>
    %c2_i32_31 = arith.constant 2 : i32
    %85 = arith.addi %0, %c2_i32_31 : i32
    %c0_32 = arith.constant 0 : index
    %86 = arith.index_cast %85 : i32 to index
    %c2_33 = arith.constant 2 : index
    %c0_34 = arith.constant 0 : index
    %87 = vector.load %arg2[%c0_32, %86, %c2_33, %c0_34] : memref<1x18x18x4xf32, #tpu.memory_space<vmem>>, vector<1x8x16x4xf32>
    %88 = vector.shape_cast %87 : vector<1x8x16x4xf32> to vector<8x16x4xf32>
    %89 = vector.extract_strided_slice %1 {offsets = [2, 2, 0], sizes = [1, 1, 4], strides = [1, 1, 1]} : vector<3x3x4xf32> to vector<1x1x4xf32>
    %90 = vector.shape_cast %89 : vector<1x1x4xf32> to vector<4xf32>
    %91 = vector.shape_cast %90 : vector<4xf32> to vector<1x1x4xf32>
    %92 = vector.broadcast %91 : vector<1x1x4xf32> to vector<8x16x4xf32>
    %93 = arith.mulf %88, %92 : vector<8x16x4xf32>
    %94 = arith.addf %84, %93 : vector<8x16x4xf32>
    %cst = arith.constant 0.000000e+00 : f32
    %95 = vector.broadcast %cst : f32 to vector<8x16x4xf32>
    %96 = arith.cmpf oge, %94, %95 : vector<8x16x4xf32>
    %cst_35 = arith.constant 0.00999999977 : f32
    %97 = vector.broadcast %cst_35 : f32 to vector<8x16x4xf32>
    %98 = arith.mulf %97, %94 : vector<8x16x4xf32>
    %99 = arith.select %96, %94, %98 : vector<8x16x4xi1>, vector<8x16x4xf32>
    %100 = vector.shape_cast %99 : vector<8x16x4xf32> to vector<128x4xf32>
    %101 = arith.truncf %100 : vector<128x4xf32> to vector<128x4xbf16>
    %c0_36 = arith.constant 0 : index
    %c0_37 = arith.constant 0 : index
    %102 = vector.load %arg5[%c0_36, %c0_37] : memref<4x8xbf16, #tpu.memory_space<vmem>>, vector<4x8xbf16>
    %cst_38 = arith.constant dense<0.000000e+00> : vector<128x8xf32>
    %103 = tpu.matmul %101, %102, %cst_38 {dimension_numbers = #tpu.dot_dimension_numbers<[1], [0], [0], [1], [0, 0, 1, 1], [], []>} : vector<128x4xbf16>, vector<4x8xbf16>, vector<128x8xf32> -> vector<128x8xf32>
    %c0_39 = arith.constant 0 : index
    %c0_40 = arith.constant 0 : index
    %104 = vector.load %arg6[%c0_39, %c0_40] : memref<1x8xf32, #tpu.memory_space<vmem>>, vector<1x8xf32>
    %105 = vector.broadcast %104 : vector<1x8xf32> to vector<128x8xf32>
    %106 = arith.addf %103, %105 : vector<128x8xf32>
    %cst_41 = arith.constant 0.000000e+00 : f32
    %107 = vector.broadcast %cst_41 : f32 to vector<128x8xf32>
    %108 = arith.cmpf oge, %106, %107 : vector<128x8xf32>
    %cst_42 = arith.constant 0.00999999977 : f32
    %109 = vector.broadcast %cst_42 : f32 to vector<128x8xf32>
    %110 = arith.mulf %109, %106 : vector<128x8xf32>
    %111 = arith.select %108, %106, %110 : vector<128x8xi1>, vector<128x8xf32>
    %112 = vector.shape_cast %111 : vector<128x8xf32> to vector<8x16x8xf32>
    %c0_43 = arith.constant 0 : index
    %c0_44 = arith.constant 0 : index
    %c0_45 = arith.constant 0 : index
    %c0_46 = arith.constant 0 : index
    %113 = vector.load %arg7[%c0_43, %c0_44, %c0_45, %c0_46] : memref<1x8x16x8xf32, #tpu.memory_space<vmem>>, vector<1x8x16x8xf32>
    %114 = vector.shape_cast %113 : vector<1x8x16x8xf32> to vector<8x16x8xf32>
    %115 = vector.shape_cast %112 : vector<8x16x8xf32> to vector<1x8x16x8xf32>
    tpu.vector_store %arg7[%c0_43, %c0_44, %c0_45, %c0_46], %115 {strides = array<i32>} : memref<1x8x16x8xf32, #tpu.memory_space<vmem>>, vector<1x8x16x8xf32>,
    return
  }
  func.func @transform_0(%arg0: i32, %arg1: i32) -> (i32, i32, i32, i32) {
    %c0_i32 = arith.constant 0 : i32
    %c0_i32_0 = arith.constant 0 : i32
    %c0_i32_1 = arith.constant 0 : i32
    %c0_i32_2 = arith.constant 0 : i32
    return %arg0, %c0_i32, %c0_i32_0, %c0_i32_1 : i32, i32, i32, i32
  }
  func.func @transform_1(%arg0: i32, %arg1: i32) -> (i32, i32, i32) {
    %c0_i32 = arith.constant 0 : i32
    %c0_i32_0 = arith.constant 0 : i32
    %c0_i32_1 = arith.constant 0 : i32
    %c0_i32_2 = arith.constant 0 : i32
    return %c0_i32, %c0_i32_0, %c0_i32_1 : i32, i32, i32
  }
  func.func @transform_2(%arg0: i32, %arg1: i32) -> (i32, i32) {
    %c0_i32 = arith.constant 0 : i32
    %c0_i32_0 = arith.constant 0 : i32
    %c0_i32_1 = arith.constant 0 : i32
    return %c0_i32, %c0_i32_0 : i32, i32
  }
  func.func @transform_3(%arg0: i32, %arg1: i32) -> (i32, i32) {
    %c0_i32 = arith.constant 0 : i32
    %c0_i32_0 = arith.constant 0 : i32
    %c0_i32_1 = arith.constant 0 : i32
    return %c0_i32, %c0_i32_0 : i32, i32
  }
  func.func @transform_4(%arg0: i32, %arg1: i32) -> (i32, i32) {
    %c0_i32 = arith.constant 0 : i32
    %c0_i32_0 = arith.constant 0 : i32
    %c0_i32_1 = arith.constant 0 : i32
    return %c0_i32, %c0_i32_0 : i32, i32
  }
  func.func @transform_5(%arg0: i32, %arg1: i32) -> (i32, i32, i32, i32) {
    %c0_i32 = arith.constant 0 : i32
    %c0_i32_0 = arith.constant 0 : i32
    %c0_i32_1 = arith.constant 0 : i32
    return %arg0, %arg1, %c0_i32, %c0_i32_0 : i32, i32, i32, i32
  }
}

</mosaic_0001>

<llo_original>
// kernel: conv_dw_forward.1
$region0: #{conv_dw_forward.1}
  #allocation0 [shape = 'u32[]', space=smem, size = 0x4, offset = 0x4, fixed_abs, tag = 'smem constant byte address 0x4 - core index']
  #allocation1 [shape = 'u32[144,128]{1,0:T(1,128)}', space=vmem, size = 0x12000, scoped, tag = 'internal scratch']
  %s0 = inlined_call_operand.vmem [shape: f32[2,18,18,4], index: 0, kind: input, shape index: {}]
  %s1 = inlined_call_operand.vmem [shape: f32[3,3,4], index: 1, kind: input, shape index: {}]
  %s2 = inlined_call_operand.vmem [shape: f32[1,4], index: 2, kind: input, shape index: {}]
  %s3 = inlined_call_operand.vmem [shape: bf16[4,8], index: 3, kind: input, shape index: {}]
  %s4 = inlined_call_operand.vmem [shape: f32[1,8], index: 4, kind: input, shape index: {}]
  %s5 = inlined_call_operand.vmem [shape: f32[2,16,16,8], index: 5, kind: output, shape index: {}]
  %s6 = sld [smem:[#allocation0]]
  $region53: #{conv_dw_forward.1} parent=0
    _
  %s8 = ssub.s32 1, %s6
  %s9 = scalar_select 0, %s8, %s6
  loop: start=0, step=1, limit=6
  $region2: #{conv_dw_forward.1} parent=0 // loop_pre_header
    _
  $region3: #{conv_dw_forward.1} parent=0 // loop_header
    %s11 = sphi 0, %s15
    %p12 = scmp.ge.s32.totalorder %s11, 6
    %s18 = sphi 0, %s30
    %s19 = sphi 0, %s26
    %s20 = sphi 0, %s18
    %s21 = sphi 0, %s19
    %s22 = sphi 0, %s20
    %s23 = sphi 0, %s21
    %s33 = sphi 0, %s35
    %s36 = sphi 0, %s33
    %s37 = sphi 0, %s36
    %s53 = sphi 0, %s37
    %s57 = sphi 0, %s57
    %s59 = sphi 0, %s57
    %s60 = sphi 0, %s59
    %s74 = sphi 0, %s60
    %s78 = sphi 0, %s78
    %s80 = sphi 0, %s78
    %s81 = sphi 0, %s80
    %s95 = sphi 0, %s81
    %s99 = sphi 0, %s99
    %s101 = sphi 0, %s99
    %s102 = sphi 0, %s101
    %s116 = sphi 0, %s102
    %s120 = sphi 0, %s120
    %s122 = sphi 0, %s120
    %s123 = sphi 0, %s122
    %s137 = sphi 0, %s123
    %s145 = sphi 0, %s147
    %s148 = sphi 0, %s145
    %s149 = sphi 0, %s148
    %s165 = sphi 0, %s149
  $region4: #{conv_dw_forward.1} parent=0 // loop_header_branch
    %14 = sbr.rel (%p12) target = $region8
  $region5: #{conv_dw_forward.1} parent=0 // loop_body
    %s16 = ssub.s32 %s11, 1
    %s17 = ssub.s32 %s11, 2
    %s24 = sadd.s32 1, %s19
    %p25 = scmp.ge.s32.totalorder %s24, 2
    %s26 = scalar_select %p25, 0, %s24
    %s27 = sadd.s32 1, %s18
    %s28 = scalar_select %p25, %s27, %s18
    %p29 = scmp.ge.s32.totalorder %s28, 2
    %s30 = scalar_select %p29, 0, %s28
    %s31 = ssub.s32 %s18, %s30
    %p32 = scmp.eq.s32.totalorder %s31, 0
    %s34 = sadd.s32 %s33, 1
    %s35 = scalar_select %p32, %s33, %s34
    %p38 = pneg %p32
    %p39 = scmp.eq.s32.totalorder %s11, 3
    %p40 = por %p38, %p39
    %p41 = scmp.ne.s32.totalorder %s33, %s36
    %p42 = scmp.eq.s32.totalorder %s11, 0
    %p43 = por %p41, %p42
    %p44 = scmp.ne.s32.totalorder %s33, %s36
    %p45 = scmp.eq.s32.totalorder %s16, 3
    %p46 = por %p44, %p45
    %p47 = scmp.ne.s32.totalorder %s36, %s37
    %p48 = scmp.eq.s32.totalorder %s16, 0
    %p49 = por %p47, %p48
    %p50 = scmp.ne.s32.totalorder %s36, %s37
    %p51 = scmp.eq.s32.totalorder %s17, 3
    %p52 = por %p50, %p51
    %p54 = scmp.ne.s32.totalorder %s37, %s53
    %p55 = scmp.eq.s32.totalorder %s17, 0
    %p56 = por %p54, %p55
    %s58 = sadd.s32 %s57, 1
    %p61 = scmp.eq.s32.totalorder %s11, 3
    %p62 = scmp.ne.s32.totalorder %s57, %s59
    %p63 = scmp.eq.s32.totalorder %s11, 0
    %p64 = por %p62, %p63
    %p65 = scmp.ne.s32.totalorder %s57, %s59
    %p66 = scmp.eq.s32.totalorder %s16, 3
    %p67 = por %p65, %p66
    %p68 = scmp.ne.s32.totalorder %s59, %s60
    %p69 = scmp.eq.s32.totalorder %s16, 0
    %p70 = por %p68, %p69
    %p71 = scmp.ne.s32.totalorder %s59, %s60
    %p72 = scmp.eq.s32.totalorder %s17, 3
    %p73 = por %p71, %p72
    %p75 = scmp.ne.s32.totalorder %s60, %s74
    %p76 = scmp.eq.s32.totalorder %s17, 0
    %p77 = por %p75, %p76
    %s79 = sadd.s32 %s78, 1
    %p82 = scmp.eq.s32.totalorder %s11, 3
    %p83 = scmp.ne.s32.totalorder %s78, %s80
    %p84 = scmp.eq.s32.totalorder %s11, 0
    %p85 = por %p83, %p84
    %p86 = scmp.ne.s32.totalorder %s78, %s80
    %p87 = scmp.eq.s32.totalorder %s16, 3
    %p88 = por %p86, %p87
    %p89 = scmp.ne.s32.totalorder %s80, %s81
    %p90 = scmp.eq.s32.totalorder %s16, 0
    %p91 = por %p89, %p90
    %p92 = scmp.ne.s32.totalorder %s80, %s81
    %p93 = scmp.eq.s32.totalorder %s17, 3
    %p94 = por %p92, %p93
    %p96 = scmp.ne.s32.totalorder %s81, %s95
    %p97 = scmp.eq.s32.totalorder %s17, 0
    %p98 = por %p96, %p97
    %s100 = sadd.s32 %s99, 1
    %p103 = scmp.eq.s32.totalorder %s11, 3
    %p104 = scmp.ne.s32.totalorder %s99, %s101
    %p105 = scmp.eq.s32.totalorder %s11, 0
    %p106 = por %p104, %p105
    %p107 = scmp.ne.s32.totalorder %s99, %s101
    %p108 = scmp.eq.s32.totalorder %s16, 3
    %p109 = por %p107, %p108
    %p110 = scmp.ne.s32.totalorder %s101, %s102
    %p111 = scmp.eq.s32.totalorder %s16, 0
    %p112 = por %p110, %p111
    %p113 = scmp.ne.s32.totalorder %s101, %s102
    %p114 = scmp.eq.s32.totalorder %s17, 3
    %p115 = por %p113, %p114
    %p117 = scmp.ne.s32.totalorder %s102, %s116
    %p118 = scmp.eq.s32.totalorder %s17, 0
    %p119 = por %p117, %p118
    %s121 = sadd.s32 %s120, 1
    %p124 = scmp.eq.s32.totalorder %s11, 3
    %p125 = scmp.ne.s32.totalorder %s120, %s122
    %p126 = scmp.eq.s32.totalorder %s11, 0
    %p127 = por %p125, %p126
    %p128 = scmp.ne.s32.totalorder %s120, %s122
    %p129 = scmp.eq.s32.totalorder %s16, 3
    %p130 = por %p128, %p129
    %p131 = scmp.ne.s32.totalorder %s122, %s123
    %p132 = scmp.eq.s32.totalorder %s16, 0
    %p133 = por %p131, %p132
    %p134 = scmp.ne.s32.totalorder %s122, %s123
    %p135 = scmp.eq.s32.totalorder %s17, 3
    %p136 = por %p134, %p135
    %p138 = scmp.ne.s32.totalorder %s123, %s137
    %p139 = scmp.eq.s32.totalorder %s17, 0
    %p140 = por %p138, %p139
    %s141 = ssub.s32 %s18, %s30
    %s142 = ssub.s32 %s19, %s26
    %s143 = sor.u32 %s141, %s142
    %p144 = scmp.eq.s32.totalorder %s143, 0
    %s146 = sadd.s32 %s145, 1
    %s147 = scalar_select %p144, %s145, %s146
    %p150 = pneg %p144
    %p151 = scmp.eq.s32.totalorder %s11, 3
    %p152 = por %p150, %p151
    %p153 = scmp.ne.s32.totalorder %s145, %s148
    %p154 = scmp.eq.s32.totalorder %s11, 0
    %p155 = por %p153, %p154
    %p156 = scmp.ne.s32.totalorder %s145, %s148
    %p157 = scmp.eq.s32.totalorder %s16, 3
    %p158 = por %p156, %p157
    %p159 = scmp.ne.s32.totalorder %s148, %s149
    %p160 = scmp.eq.s32.totalorder %s16, 0
    %p161 = por %p159, %p160
    %p162 = scmp.ne.s32.totalorder %s148, %s149
    %p163 = scmp.eq.s32.totalorder %s17, 3
    %p164 = por %p162, %p163
    %p166 = scmp.ne.s32.totalorder %s149, %s165
    %p167 = scmp.eq.s32.totalorder %s17, 0
    %p168 = por %p166, %p167
    %p169 = scmp.le.s32.totalorder 1, %s11
    %p170 = scmp.lt.s32.totalorder %s11, 5
    %p171 = pnand %p169, %p170
    %p172 = pneg %p171
    // Predicated region
    $region9: #{conv_dw_forward.1} parent=5 // pred_check
      _
    $region10: #{conv_dw_forward.1} parent=5 // pred_check_branch
      %174 = sbr.rel (%p171) target = $region12
    $region11: #{conv_dw_forward.1} parent=5 // pred_region
      %s175 = ssub.s32 %s11, 1
      // Predicated region
      $region13: #{conv_dw_forward.1} parent=11 // pred_check
        %p176 = pneg %p70
      $region14: #{conv_dw_forward.1} parent=11 // pred_check_branch
        %178 = sbr.rel (%p176) target = $region16
      $region15: #{conv_dw_forward.1} parent=11 // pred_region
        _
      $region16: #{conv_dw_forward.1} parent=11 // pred_fallthru
        _
      // Predicated region
      $region17: #{conv_dw_forward.1} parent=11 // pred_check
        %p179 = pneg %p91
      $region18: #{conv_dw_forward.1} parent=11 // pred_check_branch
        %181 = sbr.rel (%p179) target = $region20
      $region19: #{conv_dw_forward.1} parent=11 // pred_region
        _
      $region20: #{conv_dw_forward.1} parent=11 // pred_fallthru
        _
      // Predicated region
      $region21: #{conv_dw_forward.1} parent=11 // pred_check
        %p182 = pneg %p112
      $region22: #{conv_dw_forward.1} parent=11 // pred_check_branch
        %184 = sbr.rel (%p182) target = $region24
      $region23: #{conv_dw_forward.1} parent=11 // pred_region
        _
      $region24: #{conv_dw_forward.1} parent=11 // pred_fallthru
        _
      // Predicated region
      $region25: #{conv_dw_forward.1} parent=11 // pred_check
        %p185 = pneg %p133
      $region26: #{conv_dw_forward.1} parent=11 // pred_check_branch
        %187 = sbr.rel (%p185) target = $region28
      $region27: #{conv_dw_forward.1} parent=11 // pred_region
        _
      $region28: #{conv_dw_forward.1} parent=11 // pred_fallthru
        _
    $region12: #{conv_dw_forward.1} parent=5 // pred_fallthru
      _
    %p188 = scmp.lt.s32.totalorder %s11, 4
    // Predicated region
    $region29: #{conv_dw_forward.1} parent=5 // pred_check
      %p189 = pneg %p188
    $region30: #{conv_dw_forward.1} parent=5 // pred_check_branch
      %191 = sbr.rel (%p189) target = $region32
    $region31: #{conv_dw_forward.1} parent=5 // pred_region
      // Predicated region
      $region33: #{conv_dw_forward.1} parent=31 // pred_check
        %p192 = pneg %p43
      $region34: #{conv_dw_forward.1} parent=31 // pred_check_branch
        %194 = sbr.rel (%p192) target = $region36
      $region35: #{conv_dw_forward.1} parent=31 // pred_region
        %p195 = scmp.lt.s32.totalorder %s18, 1
        %s196 = scalar_select %p195, %s18, 1
        %s197 = smul.addr %s196, 54
        %s198 = smul.addr %s197, 8
        %s199 = scalar_lea.vmem %s0, %s198
      $region36: #{conv_dw_forward.1} parent=31 // pred_fallthru
        _
    $region32: #{conv_dw_forward.1} parent=5 // pred_fallthru
      _
    %p200 = scmp.le.s32.totalorder 1, %s11
    %p201 = scmp.lt.s32.totalorder %s11, 5
    %p202 = pnand %p200, %p201
    %p203 = pneg %p202
    // Predicated region
    $region37: #{conv_dw_forward.1} parent=5 // pred_check
      _
    $region38: #{conv_dw_forward.1} parent=5 // pred_check_branch
      %205 = sbr.rel (%p202) target = $region40
    $region39: #{conv_dw_forward.1} parent=5 // pred_region
      %s206 = ssub.s32 %s11, 1
      %p207 = scmp.lt.s32.totalorder %s20, 1
      %s208 = scalar_select %p207, %s20, 1
      %s209 = smul.addr %s208, 54
      %s210 = smul.addr %s209, 8
      %s211 = scalar_lea.vmem %s0, %s210
      %p212 = pneg %p49
      %p213 = pneg %p46
      %p214 = pneg %p70
      %p215 = pneg %p67
      %p216 = pneg %p91
      %p217 = pneg %p88
      %p218 = pneg %p112
      %p219 = pneg %p109
      %p220 = pneg %p133
      %p221 = pneg %p130
      %p222 = pneg %p161
      %p223 = pneg %p158
      %s224 = smul.u32 8, %s21
      %p225 = scmp.lt.s32.totalorder %s20, 1
      %s226 = scalar_select %p225, %s20, 1
      %p227 = scmp.lt.s32.totalorder %s224, 15
      %s228 = scalar_select %p227, %s224, 15
      %s229 = smul.addr %s228, 2
      %s230 = smul.addr %s226, 32
      %s231 = sadd.s32 %s229, %s230
      %s232 = smul.addr %s231, 8
      %s233 = scalar_lea.vmem %s5, %s232
      %p234 = scmp.lt.s32.totalorder %s20, 1
      %s235 = scalar_select %p234, %s20, 1
      %s236 = smul.addr %s235, 54
      %s237 = smul.addr %s236, 8
      %s238 = scalar_lea.vmem %s0, %s237
      %s239 = smul.u32 8, %s21
      %p240 = scmp.lt.s32.totalorder %s20, 1
      %s241 = scalar_select %p240, %s20, 1
      %p242 = scmp.lt.s32.totalorder %s239, 15
      %s243 = scalar_select %p242, %s239, 15
      %s244 = smul.addr %s243, 2
      %s245 = smul.addr %s241, 32
      %s246 = sadd.s32 %s244, %s245
      %s247 = smul.addr %s246, 8
      %s248 = scalar_lea.vmem %s5, %s247
      %s249 = smul.u32 8, %s21
      %s251 = smul.u32 %s21, 8
      %v252 = vld [vmem:[%s1] sm:$0x7]
      %v253 = vld [vmem:[%s1 + $0x4] sm:$0x7]
      %v254 = vld [vmem:[%s1 + $0x8] sm:$0x7]
      %v255 = vld [vmem:[%s2] sm:$0x1]
      %v257 = vlaneseq
      %v258 = vshrl.u32 %v257, 7
      %v259 = vsub.s32 0, %v258
      %v260 = vrot.slane %v255, %v259
      %s262 = smul.u32 %s251, 24
      %s263 = scalar_lea.vmem %s238, %s262
      %v264 = vld [vmem:[%s263] sm:$0xff]
      %v265 = vld [vmem:[%s263 + $0x8] sm:$0xff]
      %v266 = vld [vmem:[%s263 + $0x18] sm:$0xff]
      %v267 = vld [vmem:[%s263 + $0x20] sm:$0xff]
      %v268 = vld [vmem:[%s263 + $0x30] sm:$0xff]
      %v269 = vld [vmem:[%s263 + $0x38] sm:$0xff]
      %v270 = vld [vmem:[%s263 + $0x48] sm:$0xff]
      %v271 = vld [vmem:[%s263 + $0x50] sm:$0xff]
      %v272 = vld [vmem:[%s263 + $0x60] sm:$0xff]
      %v273 = vld [vmem:[%s263 + $0x68] sm:$0xff]
      %v274 = vld [vmem:[%s263 + $0x78] sm:$0xff]
      %v275 = vld [vmem:[%s263 + $0x80] sm:$0xff]
      %v276 = vld [vmem:[%s263 + $0x90] sm:$0xff]
      %v277 = vld [vmem:[%s263 + $0x98] sm:$0xff]
      %v278 = vld [vmem:[%s263 + $0xa8] sm:$0xff]
      %v279 = vld [vmem:[%s263 + $0xb0] sm:$0xff]
      %v280 = vlaneseq
      %v281 = vshrl.u32 %v280, 7
      %v282 = vsub.s32 0, %v281
      %v283 = vrot.slane %v252, %v282
      %v284 = vmul.f32 %v264, %v283
      %v285 = vmul.f32 %v265, %v283
      %v286 = vmul.f32 %v266, %v283
      %v287 = vmul.f32 %v267, %v283
      %v288 = vmul.f32 %v268, %v283
      %v289 = vmul.f32 %v269, %v283
      %v290 = vmul.f32 %v270, %v283
      %v291 = vmul.f32 %v271, %v283
      %v292 = vmul.f32 %v272, %v283
      %v293 = vmul.f32 %v273, %v283
      %v294 = vmul.f32 %v274, %v283
      %v295 = vmul.f32 %v275, %v283
      %v296 = vmul.f32 %v276, %v283
      %v297 = vmul.f32 %v277, %v283
      %v298 = vmul.f32 %v278, %v283
      %v299 = vmul.f32 %v279, %v283
      %v300 = vadd.f32 %v260, %v284
      %v301 = vadd.f32 %v260, %v285
      %v302 = vadd.f32 %v260, %v286
      %v303 = vadd.f32 %v260, %v287
      %v304 = vadd.f32 %v260, %v288
      %v305 = vadd.f32 %v260, %v289
      %v306 = vadd.f32 %v260, %v290
      %v307 = vadd.f32 %v260, %v291
      %v308 = vadd.f32 %v260, %v292
      %v309 = vadd.f32 %v260, %v293
      %v310 = vadd.f32 %v260, %v294
      %v311 = vadd.f32 %v260, %v295
      %v312 = vadd.f32 %v260, %v296
      %v313 = vadd.f32 %v260, %v297
      %v314 = vadd.f32 %v260, %v298
      %v315 = vadd.f32 %v260, %v299
      %v316 = vld [vmem:[%s263 + $0x1] sm:$0xff]
      %v317 = vld [vmem:[%s263 + $0x9] sm:$0xff]
      %v318 = vld [vmem:[%s263 + $0x19] sm:$0xff]
      %v319 = vld [vmem:[%s263 + $0x21] sm:$0xff]
      %v320 = vld [vmem:[%s263 + $0x31] sm:$0xff]
      %v321 = vld [vmem:[%s263 + $0x39] sm:$0xff]
      %v322 = vld [vmem:[%s263 + $0x49] sm:$0xff]
      %v323 = vld [vmem:[%s263 + $0x51] sm:$0xff]
      %v324 = vld [vmem:[%s263 + $0x61] sm:$0xff]
      %v325 = vld [vmem:[%s263 + $0x69] sm:$0xff]
      %v326 = vld [vmem:[%s263 + $0x79] sm:$0xff]
      %v327 = vld [vmem:[%s263 + $0x81] sm:$0xff]
      %v328 = vld [vmem:[%s263 + $0x91] sm:$0xff]
      %v329 = vld [vmem:[%s263 + $0x99] sm:$0xff]
      %v330 = vld [vmem:[%s263 + $0xa9] sm:$0xff]
      %v331 = vld [vmem:[%s263 + $0xb1] sm:$0xff]
      %v332 = vlaneseq
      %v333 = vshrl.u32 %v332, 7
      %v334 = vsub.s32 1, %v333
      %v335 = vrot.slane %v252, %v334
      %v336 = vmul.f32 %v316, %v335
      %v337 = vmul.f32 %v317, %v335
      %v338 = vmul.f32 %v318, %v335
      %v339 = vmul.f32 %v319, %v335
      %v340 = vmul.f32 %v320, %v335
      %v341 = vmul.f32 %v321, %v335
      %v342 = vmul.f32 %v322, %v335
      %v343 = vmul.f32 %v323, %v335
      %v344 = vmul.f32 %v324, %v335
      %v345 = vmul.f32 %v325, %v335
      %v346 = vmul.f32 %v326, %v335
      %v347 = vmul.f32 %v327, %v335
      %v348 = vmul.f32 %v328, %v335
      %v349 = vmul.f32 %v329, %v335
      %v350 = vmul.f32 %v330, %v335
      %v351 = vmul.f32 %v331, %v335
      %v352 = vadd.f32 %v300, %v336
      %v353 = vadd.f32 %v301, %v337
      %v354 = vadd.f32 %v302, %v338
      %v355 = vadd.f32 %v303, %v339
      %v356 = vadd.f32 %v304, %v340
      %v357 = vadd.f32 %v305, %v341
      %v358 = vadd.f32 %v306, %v342
      %v359 = vadd.f32 %v307, %v343
      %v360 = vadd.f32 %v308, %v344
      %v361 = vadd.f32 %v309, %v345
      %v362 = vadd.f32 %v310, %v346
      %v363 = vadd.f32 %v311, %v347
      %v364 = vadd.f32 %v312, %v348
      %v365 = vadd.f32 %v313, %v349
      %v366 = vadd.f32 %v314, %v350
      %v367 = vadd.f32 %v315, %v351
      %v368 = vld [vmem:[%s263 + $0x2] sm:$0xff]
      %v369 = vld [vmem:[%s263 + $0xa] sm:$0xff]
      %v370 = vld [vmem:[%s263 + $0x1a] sm:$0xff]
      %v371 = vld [vmem:[%s263 + $0x22] sm:$0xff]
      %v372 = vld [vmem:[%s263 + $0x32] sm:$0xff]
      %v373 = vld [vmem:[%s263 + $0x3a] sm:$0xff]
      %v374 = vld [vmem:[%s263 + $0x4a] sm:$0xff]
      %v375 = vld [vmem:[%s263 + $0x52] sm:$0xff]
      %v376 = vld [vmem:[%s263 + $0x62] sm:$0xff]
      %v377 = vld [vmem:[%s263 + $0x6a] sm:$0xff]
      %v378 = vld [vmem:[%s263 + $0x7a] sm:$0xff]
      %v379 = vld [vmem:[%s263 + $0x82] sm:$0xff]
      %v380 = vld [vmem:[%s263 + $0x92] sm:$0xff]
      %v381 = vld [vmem:[%s263 + $0x9a] sm:$0xff]
      %v382 = vld [vmem:[%s263 + $0xaa] sm:$0xff]
      %v383 = vld [vmem:[%s263 + $0xb2] sm:$0xff]
      %v384 = vlaneseq
      %v385 = vshrl.u32 %v384, 7
      %v386 = vsub.s32 2, %v385
      %v387 = vrot.slane %v252, %v386
      %v388 = vmul.f32 %v368, %v387
      %v389 = vmul.f32 %v369, %v387
      %v390 = vmul.f32 %v370, %v387
      %v391 = vmul.f32 %v371, %v387
      %v392 = vmul.f32 %v372, %v387
      %v393 = vmul.f32 %v373, %v387
      %v394 = vmul.f32 %v374, %v387
      %v395 = vmul.f32 %v375, %v387
      %v396 = vmul.f32 %v376, %v387
      %v397 = vmul.f32 %v377, %v387
      %v398 = vmul.f32 %v378, %v387
      %v399 = vmul.f32 %v379, %v387
      %v400 = vmul.f32 %v380, %v387
      %v401 = vmul.f32 %v381, %v387
      %v402 = vmul.f32 %v382, %v387
      %v403 = vmul.f32 %v383, %v387
      %v404 = vadd.f32 %v352, %v388
      %v405 = vadd.f32 %v353, %v389
      %v406 = vadd.f32 %v354, %v390
      %v407 = vadd.f32 %v355, %v391
      %v408 = vadd.f32 %v356, %v392
      %v409 = vadd.f32 %v357, %v393
      %v410 = vadd.f32 %v358, %v394
      %v411 = vadd.f32 %v359, %v395
      %v412 = vadd.f32 %v360, %v396
      %v413 = vadd.f32 %v361, %v397
      %v414 = vadd.f32 %v362, %v398
      %v415 = vadd.f32 %v363, %v399
      %v416 = vadd.f32 %v364, %v400
      %v417 = vadd.f32 %v365, %v401
      %v418 = vadd.f32 %v366, %v402
      %v419 = vadd.f32 %v367, %v403
      %s420 = sadd.s32 %s251, 1
      %s421 = smul.u32 %s420, 24
      %s422 = scalar_lea.vmem %s238, %s421
      %v423 = vld [vmem:[%s422] sm:$0xff]
      %v424 = vld [vmem:[%s422 + $0x8] sm:$0xff]
      %v425 = vld [vmem:[%s422 + $0x18] sm:$0xff]
      %v426 = vld [vmem:[%s422 + $0x20] sm:$0xff]
      %v427 = vld [vmem:[%s422 + $0x30] sm:$0xff]
      %v428 = vld [vmem:[%s422 + $0x38] sm:$0xff]
      %v429 = vld [vmem:[%s422 + $0x48] sm:$0xff]
      %v430 = vld [vmem:[%s422 + $0x50] sm:$0xff]
      %v431 = vld [vmem:[%s422 + $0x60] sm:$0xff]
      %v432 = vld [vmem:[%s422 + $0x68] sm:$0xff]
      %v433 = vld [vmem:[%s422 + $0x78] sm:$0xff]
      %v434 = vld [vmem:[%s422 + $0x80] sm:$0xff]
      %v435 = vld [vmem:[%s422 + $0x90] sm:$0xff]
      %v436 = vld [vmem:[%s422 + $0x98] sm:$0xff]
      %v437 = vld [vmem:[%s422 + $0xa8] sm:$0xff]
      %v438 = vld [vmem:[%s422 + $0xb0] sm:$0xff]
      %v439 = vlaneseq
      %v440 = vshrl.u32 %v439, 7
      %v441 = vsub.s32 0, %v440
      %v442 = vrot.slane %v253, %v441
      %v443 = vmul.f32 %v423, %v442
      %v444 = vmul.f32 %v424, %v442
      %v445 = vmul.f32 %v425, %v442
      %v446 = vmul.f32 %v426, %v442
      %v447 = vmul.f32 %v427, %v442
      %v448 = vmul.f32 %v428, %v442
      %v449 = vmul.f32 %v429, %v442
      %v450 = vmul.f32 %v430, %v442
      %v451 = vmul.f32 %v431, %v442
      %v452 = vmul.f32 %v432, %v442
      %v453 = vmul.f32 %v433, %v442
      %v454 = vmul.f32 %v434, %v442
      %v455 = vmul.f32 %v435, %v442
      %v456 = vmul.f32 %v436, %v442
      %v457 = vmul.f32 %v437, %v442
      %v458 = vmul.f32 %v438, %v442
      %v459 = vadd.f32 %v404, %v443
      %v460 = vadd.f32 %v405, %v444
      %v461 = vadd.f32 %v406, %v445
      %v462 = vadd.f32 %v407, %v446
      %v463 = vadd.f32 %v408, %v447
      %v464 = vadd.f32 %v409, %v448
      %v465 = vadd.f32 %v410, %v449
      %v466 = vadd.f32 %v411, %v450
      %v467 = vadd.f32 %v412, %v451
      %v468 = vadd.f32 %v413, %v452
      %v469 = vadd.f32 %v414, %v453
      %v470 = vadd.f32 %v415, %v454
      %v471 = vadd.f32 %v416, %v455
      %v472 = vadd.f32 %v417, %v456
      %v473 = vadd.f32 %v418, %v457
      %v474 = vadd.f32 %v419, %v458
      %v475 = vld [vmem:[%s422 + $0x1] sm:$0xff]
      %v476 = vld [vmem:[%s422 + $0x9] sm:$0xff]
      %v477 = vld [vmem:[%s422 + $0x19] sm:$0xff]
      %v478 = vld [vmem:[%s422 + $0x21] sm:$0xff]
      %v479 = vld [vmem:[%s422 + $0x31] sm:$0xff]
      %v480 = vld [vmem:[%s422 + $0x39] sm:$0xff]
      %v481 = vld [vmem:[%s422 + $0x49] sm:$0xff]
      %v482 = vld [vmem:[%s422 + $0x51] sm:$0xff]
      %v483 = vld [vmem:[%s422 + $0x61] sm:$0xff]
      %v484 = vld [vmem:[%s422 + $0x69] sm:$0xff]
      %v485 = vld [vmem:[%s422 + $0x79] sm:$0xff]
      %v486 = vld [vmem:[%s422 + $0x81] sm:$0xff]
      %v487 = vld [vmem:[%s422 + $0x91] sm:$0xff]
      %v488 = vld [vmem:[%s422 + $0x99] sm:$0xff]
      %v489 = vld [vmem:[%s422 + $0xa9] sm:$0xff]
      %v490 = vld [vmem:[%s422 + $0xb1] sm:$0xff]
      %v491 = vlaneseq
      %v492 = vshrl.u32 %v491, 7
      %v493 = vsub.s32 1, %v492
      %v494 = vrot.slane %v253, %v493
      %v495 = vmul.f32 %v475, %v494
      %v496 = vmul.f32 %v476, %v494
      %v497 = vmul.f32 %v477, %v494
      %v498 = vmul.f32 %v478, %v494
      %v499 = vmul.f32 %v479, %v494
      %v500 = vmul.f32 %v480, %v494
      %v501 = vmul.f32 %v481, %v494
      %v502 = vmul.f32 %v482, %v494
      %v503 = vmul.f32 %v483, %v494
      %v504 = vmul.f32 %v484, %v494
      %v505 = vmul.f32 %v485, %v494
      %v506 = vmul.f32 %v486, %v494
      %v507 = vmul.f32 %v487, %v494
      %v508 = vmul.f32 %v488, %v494
      %v509 = vmul.f32 %v489, %v494
      %v510 = vmul.f32 %v490, %v494
      %v511 = vadd.f32 %v459, %v495
      %v512 = vadd.f32 %v460, %v496
      %v513 = vadd.f32 %v461, %v497
      %v514 = vadd.f32 %v462, %v498
      %v515 = vadd.f32 %v463, %v499
      %v516 = vadd.f32 %v464, %v500
      %v517 = vadd.f32 %v465, %v501
      %v518 = vadd.f32 %v466, %v502
      %v519 = vadd.f32 %v467, %v503
      %v520 = vadd.f32 %v468, %v504
      %v521 = vadd.f32 %v469, %v505
      %v522 = vadd.f32 %v470, %v506
      %v523 = vadd.f32 %v471, %v507
      %v524 = vadd.f32 %v472, %v508
      %v525 = vadd.f32 %v473, %v509
      %v526 = vadd.f32 %v474, %v510
      %v527 = vld [vmem:[%s422 + $0x2] sm:$0xff]
      %v528 = vld [vmem:[%s422 + $0xa] sm:$0xff]
      %v529 = vld [vmem:[%s422 + $0x1a] sm:$0xff]
      %v530 = vld [vmem:[%s422 + $0x22] sm:$0xff]
      %v531 = vld [vmem:[%s422 + $0x32] sm:$0xff]
      %v532 = vld [vmem:[%s422 + $0x3a] sm:$0xff]
      %v533 = vld [vmem:[%s422 + $0x4a] sm:$0xff]
      %v534 = vld [vmem:[%s422 + $0x52] sm:$0xff]
      %v535 = vld [vmem:[%s422 + $0x62] sm:$0xff]
      %v536 = vld [vmem:[%s422 + $0x6a] sm:$0xff]
      %v537 = vld [vmem:[%s422 + $0x7a] sm:$0xff]
      %v538 = vld [vmem:[%s422 + $0x82] sm:$0xff]
      %v539 = vld [vmem:[%s422 + $0x92] sm:$0xff]
      %v540 = vld [vmem:[%s422 + $0x9a] sm:$0xff]
      %v541 = vld [vmem:[%s422 + $0xaa] sm:$0xff]
      %v542 = vld [vmem:[%s422 + $0xb2] sm:$0xff]
      %v543 = vlaneseq
      %v544 = vshrl.u32 %v543, 7
      %v545 = vsub.s32 2, %v544
      %v546 = vrot.slane %v253, %v545
      %v547 = vmul.f32 %v527, %v546
      %v548 = vmul.f32 %v528, %v546
      %v549 = vmul.f32 %v529, %v546
      %v550 = vmul.f32 %v530, %v546
      %v551 = vmul.f32 %v531, %v546
      %v552 = vmul.f32 %v532, %v546
      %v553 = vmul.f32 %v533, %v546
      %v554 = vmul.f32 %v534, %v546
      %v555 = vmul.f32 %v535, %v546
      %v556 = vmul.f32 %v536, %v546
      %v557 = vmul.f32 %v537, %v546
      %v558 = vmul.f32 %v538, %v546
      %v559 = vmul.f32 %v539, %v546
      %v560 = vmul.f32 %v540, %v546
      %v561 = vmul.f32 %v541, %v546
      %v562 = vmul.f32 %v542, %v546
      %v563 = vadd.f32 %v511, %v547
      %v564 = vadd.f32 %v512, %v548
      %v565 = vadd.f32 %v513, %v549
      %v566 = vadd.f32 %v514, %v550
      %v567 = vadd.f32 %v515, %v551
      %v568 = vadd.f32 %v516, %v552
      %v569 = vadd.f32 %v517, %v553
      %v570 = vadd.f32 %v518, %v554
      %v571 = vadd.f32 %v519, %v555
      %v572 = vadd.f32 %v520, %v556
      %v573 = vadd.f32 %v521, %v557
      %v574 = vadd.f32 %v522, %v558
      %v575 = vadd.f32 %v523, %v559
      %v576 = vadd.f32 %v524, %v560
      %v577 = vadd.f32 %v525, %v561
      %v578 = vadd.f32 %v526, %v562
      %s579 = sadd.s32 %s251, 2
      %s580 = smul.u32 %s579, 24
      %s581 = scalar_lea.vmem %s238, %s580
      %v582 = vld [vmem:[%s581] sm:$0xff]
      %v583 = vld [vmem:[%s581 + $0x8] sm:$0xff]
      %v584 = vld [vmem:[%s581 + $0x18] sm:$0xff]
      %v585 = vld [vmem:[%s581 + $0x20] sm:$0xff]
      %v586 = vld [vmem:[%s581 + $0x30] sm:$0xff]
      %v587 = vld [vmem:[%s581 + $0x38] sm:$0xff]
      %v588 = vld [vmem:[%s581 + $0x48] sm:$0xff]
      %v589 = vld [vmem:[%s581 + $0x50] sm:$0xff]
      %v590 = vld [vmem:[%s581 + $0x60] sm:$0xff]
      %v591 = vld [vmem:[%s581 + $0x68] sm:$0xff]
      %v592 = vld [vmem:[%s581 + $0x78] sm:$0xff]
      %v593 = vld [vmem:[%s581 + $0x80] sm:$0xff]
      %v594 = vld [vmem:[%s581 + $0x90] sm:$0xff]
      %v595 = vld [vmem:[%s581 + $0x98] sm:$0xff]
      %v596 = vld [vmem:[%s581 + $0xa8] sm:$0xff]
      %v597 = vld [vmem:[%s581 + $0xb0] sm:$0xff]
      %v598 = vlaneseq
      %v599 = vshrl.u32 %v598, 7
      %v600 = vsub.s32 0, %v599
      %v601 = vrot.slane %v254, %v600
      %v602 = vmul.f32 %v582, %v601
      %v603 = vmul.f32 %v583, %v601
      %v604 = vmul.f32 %v584, %v601
      %v605 = vmul.f32 %v585, %v601
      %v606 = vmul.f32 %v586, %v601
      %v607 = vmul.f32 %v587, %v601
      %v608 = vmul.f32 %v588, %v601
      %v609 = vmul.f32 %v589, %v601
      %v610 = vmul.f32 %v590, %v601
      %v611 = vmul.f32 %v591, %v601
      %v612 = vmul.f32 %v592, %v601
      %v613 = vmul.f32 %v593, %v601
      %v614 = vmul.f32 %v594, %v601
      %v615 = vmul.f32 %v595, %v601
      %v616 = vmul.f32 %v596, %v601
      %v617 = vmul.f32 %v597, %v601
      %v618 = vadd.f32 %v563, %v602
      %v619 = vadd.f32 %v564, %v603
      %v620 = vadd.f32 %v565, %v604
      %v621 = vadd.f32 %v566, %v605
      %v622 = vadd.f32 %v567, %v606
      %v623 = vadd.f32 %v568, %v607
      %v624 = vadd.f32 %v569, %v608
      %v625 = vadd.f32 %v570, %v609
      %v626 = vadd.f32 %v571, %v610
      %v627 = vadd.f32 %v572, %v611
      %v628 = vadd.f32 %v573, %v612
      %v629 = vadd.f32 %v574, %v613
      %v630 = vadd.f32 %v575, %v614
      %v631 = vadd.f32 %v576, %v615
      %v632 = vadd.f32 %v577, %v616
      %v633 = vadd.f32 %v578, %v617
      %v634 = vld [vmem:[%s581 + $0x1] sm:$0xff]
      %v635 = vld [vmem:[%s581 + $0x9] sm:$0xff]
      %v636 = vld [vmem:[%s581 + $0x19] sm:$0xff]
      %v637 = vld [vmem:[%s581 + $0x21] sm:$0xff]
      %v638 = vld [vmem:[%s581 + $0x31] sm:$0xff]
      %v639 = vld [vmem:[%s581 + $0x39] sm:$0xff]
      %v640 = vld [vmem:[%s581 + $0x49] sm:$0xff]
      %v641 = vld [vmem:[%s581 + $0x51] sm:$0xff]
      %v642 = vld [vmem:[%s581 + $0x61] sm:$0xff]
      %v643 = vld [vmem:[%s581 + $0x69] sm:$0xff]
      %v644 = vld [vmem:[%s581 + $0x79] sm:$0xff]
      %v645 = vld [vmem:[%s581 + $0x81] sm:$0xff]
      %v646 = vld [vmem:[%s581 + $0x91] sm:$0xff]
      %v647 = vld [vmem:[%s581 + $0x99] sm:$0xff]
      %v648 = vld [vmem:[%s581 + $0xa9] sm:$0xff]
      %v649 = vld [vmem:[%s581 + $0xb1] sm:$0xff]
      %v650 = vlaneseq
      %v651 = vshrl.u32 %v650, 7
      %v652 = vsub.s32 1, %v651
      %v653 = vrot.slane %v254, %v652
      %v654 = vmul.f32 %v634, %v653
      %v655 = vmul.f32 %v635, %v653
      %v656 = vmul.f32 %v636, %v653
      %v657 = vmul.f32 %v637, %v653
      %v658 = vmul.f32 %v638, %v653
      %v659 = vmul.f32 %v639, %v653
      %v660 = vmul.f32 %v640, %v653
      %v661 = vmul.f32 %v641, %v653
      %v662 = vmul.f32 %v642, %v653
      %v663 = vmul.f32 %v643, %v653
      %v664 = vmul.f32 %v644, %v653
      %v665 = vmul.f32 %v645, %v653
      %v666 = vmul.f32 %v646, %v653
      %v667 = vmul.f32 %v647, %v653
      %v668 = vmul.f32 %v648, %v653
      %v669 = vmul.f32 %v649, %v653
      %v670 = vadd.f32 %v618, %v654
      %v671 = vadd.f32 %v619, %v655
      %v672 = vadd.f32 %v620, %v656
      %v673 = vadd.f32 %v621, %v657
      %v674 = vadd.f32 %v622, %v658
      %v675 = vadd.f32 %v623, %v659
      %v676 = vadd.f32 %v624, %v660
      %v677 = vadd.f32 %v625, %v661
      %v678 = vadd.f32 %v626, %v662
      %v679 = vadd.f32 %v627, %v663
      %v680 = vadd.f32 %v628, %v664
      %v681 = vadd.f32 %v629, %v665
      %v682 = vadd.f32 %v630, %v666
      %v683 = vadd.f32 %v631, %v667
      %v684 = vadd.f32 %v632, %v668
      %v685 = vadd.f32 %v633, %v669
      %v686 = vld [vmem:[%s581 + $0x2] sm:$0xff]
      %v687 = vld [vmem:[%s581 + $0xa] sm:$0xff]
      %v688 = vld [vmem:[%s581 + $0x1a] sm:$0xff]
      %v689 = vld [vmem:[%s581 + $0x22] sm:$0xff]
      %v690 = vld [vmem:[%s581 + $0x32] sm:$0xff]
      %v691 = vld [vmem:[%s581 + $0x3a] sm:$0xff]
      %v692 = vld [vmem:[%s581 + $0x4a] sm:$0xff]
      %v693 = vld [vmem:[%s581 + $0x52] sm:$0xff]
      %v694 = vld [vmem:[%s581 + $0x62] sm:$0xff]
      %v695 = vld [vmem:[%s581 + $0x6a] sm:$0xff]
      %v696 = vld [vmem:[%s581 + $0x7a] sm:$0xff]
      %v697 = vld [vmem:[%s581 + $0x82] sm:$0xff]
      %v698 = vld [vmem:[%s581 + $0x92] sm:$0xff]
      %v699 = vld [vmem:[%s581 + $0x9a] sm:$0xff]
      %v700 = vld [vmem:[%s581 + $0xaa] sm:$0xff]
      %v701 = vld [vmem:[%s581 + $0xb2] sm:$0xff]
      %v702 = vlaneseq
      %v703 = vshrl.u32 %v702, 7
      %v704 = vsub.s32 2, %v703
      %v705 = vrot.slane %v254, %v704
      %v706 = vmul.f32 %v686, %v705
      %v707 = vmul.f32 %v687, %v705
      %v708 = vmul.f32 %v688, %v705
      %v709 = vmul.f32 %v689, %v705
      %v710 = vmul.f32 %v690, %v705
      %v711 = vmul.f32 %v691, %v705
      %v712 = vmul.f32 %v692, %v705
      %v713 = vmul.f32 %v693, %v705
      %v714 = vmul.f32 %v694, %v705
      %v715 = vmul.f32 %v695, %v705
      %v716 = vmul.f32 %v696, %v705
      %v717 = vmul.f32 %v697, %v705
      %v718 = vmul.f32 %v698, %v705
      %v719 = vmul.f32 %v699, %v705
      %v720 = vmul.f32 %v700, %v705
      %v721 = vmul.f32 %v701, %v705
      %v722 = vadd.f32 %v670, %v706
      %v723 = vadd.f32 %v671, %v707
      %v724 = vadd.f32 %v672, %v708
      %v725 = vadd.f32 %v673, %v709
      %v726 = vadd.f32 %v674, %v710
      %v727 = vadd.f32 %v675, %v711
      %v728 = vadd.f32 %v676, %v712
      %v729 = vadd.f32 %v677, %v713
      %v730 = vadd.f32 %v678, %v714
      %v731 = vadd.f32 %v679, %v715
      %v732 = vadd.f32 %v680, %v716
      %v733 = vadd.f32 %v681, %v717
      %v734 = vadd.f32 %v682, %v718
      %v735 = vadd.f32 %v683, %v719
      %v736 = vadd.f32 %v684, %v720
      %v737 = vadd.f32 %v685, %v721
      %vm738 = vcmp.ge.f32.partialorder %v722, 0.0
      %vm739 = vcmp.ge.f32.partialorder %v723, 0.0
      %vm740 = vcmp.ge.f32.partialorder %v724, 0.0
      %vm741 = vcmp.ge.f32.partialorder %v725, 0.0
      %vm742 = vcmp.ge.f32.partialorder %v726, 0.0
      %vm743 = vcmp.ge.f32.partialorder %v727, 0.0
      %vm744 = vcmp.ge.f32.partialorder %v728, 0.0
      %vm745 = vcmp.ge.f32.partialorder %v729, 0.0
      %vm746 = vcmp.ge.f32.partialorder %v730, 0.0
      %vm747 = vcmp.ge.f32.partialorder %v731, 0.0
      %vm748 = vcmp.ge.f32.partialorder %v732, 0.0
      %vm749 = vcmp.ge.f32.partialorder %v733, 0.0
      %vm750 = vcmp.ge.f32.partialorder %v734, 0.0
      %vm751 = vcmp.ge.f32.partialorder %v735, 0.0
      %vm752 = vcmp.ge.f32.partialorder %v736, 0.0
      %vm753 = vcmp.ge.f32.partialorder %v737, 0.0
      %v754 = vmul.f32 %v722, 0.01
      %v755 = vmul.f32 %v723, 0.01
      %v756 = vmul.f32 %v724, 0.01
      %v757 = vmul.f32 %v725, 0.01
      %v758 = vmul.f32 %v726, 0.01
      %v759 = vmul.f32 %v727, 0.01
      %v760 = vmul.f32 %v728, 0.01
      %v761 = vmul.f32 %v729, 0.01
      %v762 = vmul.f32 %v730, 0.01
      %v763 = vmul.f32 %v731, 0.01
      %v764 = vmul.f32 %v732, 0.01
      %v765 = vmul.f32 %v733, 0.01
      %v766 = vmul.f32 %v734, 0.01
      %v767 = vmul.f32 %v735, 0.01
      %v768 = vmul.f32 %v736, 0.01
      %v769 = vmul.f32 %v737, 0.01
      %v770 = vsel %vm738, %v722, %v754
      %v771 = vsel %vm739, %v723, %v755
      %v772 = vsel %vm740, %v724, %v756
      %v773 = vsel %vm741, %v725, %v757
      %v774 = vsel %vm742, %v726, %v758
      %v775 = vsel %vm743, %v727, %v759
      %v776 = vsel %vm744, %v728, %v760
      %v777 = vsel %vm745, %v729, %v761
      %v778 = vsel %vm746, %v730, %v762
      %v779 = vsel %vm747, %v731, %v763
      %v780 = vsel %vm748, %v732, %v764
      %v781 = vsel %vm749, %v733, %v765
      %v782 = vsel %vm750, %v734, %v766
      %v783 = vsel %vm751, %v735, %v767
      %v784 = vsel %vm752, %v736, %v768
      %v785 = vsel %vm753, %v737, %v769
      %v786 = vpack.c.bf16 %v771, %v770
      %v787 = vpack.c.bf16 %v773, %v772
      %v788 = vpack.c.bf16 %v775, %v774
      %v789 = vpack.c.bf16 %v777, %v776
      %v790 = vpack.c.bf16 %v779, %v778
      %v791 = vpack.c.bf16 %v781, %v780
      %v792 = vpack.c.bf16 %v783, %v782
      %v793 = vpack.c.bf16 %v785, %v784
      %v794 = vld [vmem:[%s3] sm:$0x3]
      %v795 = vld [vmem:[%s4] sm:$0x1]
      %v797 = vlaneseq
      %v798 = vshrl.u32 %v797, 7
      %v799 = vsub.s32 0, %v798
      %v800 = vrot.slane %v795, %v799
      %vm802 = vcmask 31744
      %v804 = vsel %vm802, %v786, 0
      %v807 = vsel %vm802, %v787, 0
      %v810 = vsel %vm802, %v788, 0
      %v813 = vsel %vm802, %v789, 0
      %v816 = vsel %vm802, %v790, 0
      %v819 = vsel %vm802, %v791, 0
      %v822 = vsel %vm802, %v792, 0
      %v825 = vsel %vm802, %v793, 0
      %vm827 = vcmask 1041408
      %v829 = vsel %vm827, %v794, 0
      %831 = vmatprep.subr.bf16.mxu0 0
      %832 = vmatpush1.bf16.msra.mxu0 %v829
      %833 = vmatprep.subr.bf16.mxu0 0
      %834 = vmatpush1.bf16.msra.mxu0 0
      %835 = vmatprep.subr.bf16.mxu0 0
      %836 = vmatpush1.bf16.msra.mxu0 0
      %837 = vmatprep.subr.bf16.mxu0 0
      %838 = vmatpush1.bf16.msra.mxu0 0
      %839 = vmatprep.subr.bf16.mxu0 0
      %840 = vmatpush1.bf16.msra.mxu0 0
      %841 = vmatprep.subr.bf16.mxu0 0
      %842 = vmatpush1.bf16.msra.mxu0 0
      %843 = vmatprep.subr.bf16.mxu0 0
      %844 = vmatpush1.bf16.msra.mxu0 0
      %845 = vmatprep.subr.bf16.mxu0 0
      %846 = vmatpush1.bf16.msra.mxu0 0
      %847 = vmatprep.subr.bf16.mxu0 0
      %848 = vmatpush1.bf16.msra.mxu0 0
      %849 = vmatprep.subr.bf16.mxu0 0
      %850 = vmatpush1.bf16.msra.mxu0 0
      %851 = vmatprep.subr.bf16.mxu0 0
      %852 = vmatpush1.bf16.msra.mxu0 0
      %853 = vmatprep.subr.bf16.mxu0 0
      %854 = vmatpush1.bf16.msra.mxu0 0
      %855 = vmatprep.subr.bf16.mxu0 0
      %856 = vmatpush1.bf16.msra.mxu0 0
      %857 = vmatprep.subr.bf16.mxu0 0
      %858 = vmatpush1.bf16.msra.mxu0 0
      %859 = vmatprep.subr.bf16.mxu0 0
      %860 = vmatpush1.bf16.msra.mxu0 0
      %861 = vmatprep.subr.bf16.mxu0 0
      %862 = vmatpush1.bf16.msra.mxu0 0
      %863 = vmatprep.mubr.bf16.mxu0 0
      %864 = vmatmul.mubr.bf16.gmra.mrb[0].mxu0 %v804
      %v865 = vpop.f32.mrb[0].mxu0
      %v866 = vadd.f32 %v800, %v865
      %v867 = vpop.f32.mrb[0].mxu0
      %v868 = vpop.f32.mrb[0].mxu0
      %v869 = vadd.f32 %v800, %v868
      %v870 = vpop.f32.mrb[0].mxu0
      %871 = vmatprep.mubr.bf16.mxu0 0
      %872 = vmatmul.mubr.bf16.gmra.mrb[0].mxu0 %v807
      %v873 = vpop.f32.mrb[0].mxu0
      %v874 = vadd.f32 %v800, %v873
      %v875 = vpop.f32.mrb[0].mxu0
      %v876 = vpop.f32.mrb[0].mxu0
      %v877 = vadd.f32 %v800, %v876
      %v878 = vpop.f32.mrb[0].mxu0
      %879 = vmatprep.mubr.bf16.mxu0 0
      %880 = vmatmul.mubr.bf16.gmra.mrb[0].mxu0 %v810
      %v881 = vpop.f32.mrb[0].mxu0
      %v882 = vadd.f32 %v800, %v881
      %v883 = vpop.f32.mrb[0].mxu0
      %v884 = vpop.f32.mrb[0].mxu0
      %v885 = vadd.f32 %v800, %v884
      %v886 = vpop.f32.mrb[0].mxu0
      %887 = vmatprep.mubr.bf16.mxu0 0
      %888 = vmatmul.mubr.bf16.gmra.mrb[0].mxu0 %v813
      %v889 = vpop.f32.mrb[0].mxu0
      %v890 = vadd.f32 %v800, %v889
      %v891 = vpop.f32.mrb[0].mxu0
      %v892 = vpop.f32.mrb[0].mxu0
      %v893 = vadd.f32 %v800, %v892
      %v894 = vpop.f32.mrb[0].mxu0
      %895 = vmatprep.mubr.bf16.mxu0 0
      %896 = vmatmul.mubr.bf16.gmra.mrb[0].mxu0 %v816
      %v897 = vpop.f32.mrb[0].mxu0
      %v898 = vadd.f32 %v800, %v897
      %v899 = vpop.f32.mrb[0].mxu0
      %v900 = vpop.f32.mrb[0].mxu0
      %v901 = vadd.f32 %v800, %v900
      %v902 = vpop.f32.mrb[0].mxu0
      %903 = vmatprep.mubr.bf16.mxu0 0
      %904 = vmatmul.mubr.bf16.gmra.mrb[0].mxu0 %v819
      %v905 = vpop.f32.mrb[0].mxu0
      %v906 = vadd.f32 %v800, %v905
      %v907 = vpop.f32.mrb[0].mxu0
      %v908 = vpop.f32.mrb[0].mxu0
      %v909 = vadd.f32 %v800, %v908
      %v910 = vpop.f32.mrb[0].mxu0
      %911 = vmatprep.mubr.bf16.mxu0 0
      %912 = vmatmul.mubr.bf16.gmra.mrb[0].mxu0 %v822
      %v913 = vpop.f32.mrb[0].mxu0
      %v914 = vadd.f32 %v800, %v913
      %v915 = vpop.f32.mrb[0].mxu0
      %v916 = vpop.f32.mrb[0].mxu0
      %v917 = vadd.f32 %v800, %v916
      %v918 = vpop.f32.mrb[0].mxu0
      %919 = vmatprep.mubr.bf16.mxu0 0
      %920 = vmatmul.mubr.bf16.gmra.mrb[0].mxu0 %v825
      %v921 = vpop.f32.mrb[0].mxu0
      %v922 = vadd.f32 %v800, %v921
      %v923 = vpop.f32.mrb[0].mxu0
      %v924 = vpop.f32.mrb[0].mxu0
      %v925 = vadd.f32 %v800, %v924
      %v926 = vpop.f32.mrb[0].mxu0
      %927 = vdwg.mxu0
      %vm928 = vcmp.ge.f32.partialorder %v866, 0.0
      %vm929 = vcmp.ge.f32.partialorder %v869, 0.0
      %vm930 = vcmp.ge.f32.partialorder %v874, 0.0
      %vm931 = vcmp.ge.f32.partialorder %v877, 0.0
      %vm932 = vcmp.ge.f32.partialorder %v882, 0.0
      %vm933 = vcmp.ge.f32.partialorder %v885, 0.0
      %vm934 = vcmp.ge.f32.partialorder %v890, 0.0
      %vm935 = vcmp.ge.f32.partialorder %v893, 0.0
      %vm936 = vcmp.ge.f32.partialorder %v898, 0.0
      %vm937 = vcmp.ge.f32.partialorder %v901, 0.0
      %vm938 = vcmp.ge.f32.partialorder %v906, 0.0
      %vm939 = vcmp.ge.f32.partialorder %v909, 0.0
      %vm940 = vcmp.ge.f32.partialorder %v914, 0.0
      %vm941 = vcmp.ge.f32.partialorder %v917, 0.0
      %vm942 = vcmp.ge.f32.partialorder %v922, 0.0
      %vm943 = vcmp.ge.f32.partialorder %v925, 0.0
      %v944 = vmul.f32 %v866, 0.01
      %v945 = vmul.f32 %v869, 0.01
      %v946 = vmul.f32 %v874, 0.01
      %v947 = vmul.f32 %v877, 0.01
      %v948 = vmul.f32 %v882, 0.01
      %v949 = vmul.f32 %v885, 0.01
      %v950 = vmul.f32 %v890, 0.01
      %v951 = vmul.f32 %v893, 0.01
      %v952 = vmul.f32 %v898, 0.01
      %v953 = vmul.f32 %v901, 0.01
      %v954 = vmul.f32 %v906, 0.01
      %v955 = vmul.f32 %v909, 0.01
      %v956 = vmul.f32 %v914, 0.01
      %v957 = vmul.f32 %v917, 0.01
      %v958 = vmul.f32 %v922, 0.01
      %v959 = vmul.f32 %v925, 0.01
      %v960 = vsel %vm928, %v866, %v944
      %v961 = vsel %vm929, %v869, %v945
      %v962 = vsel %vm930, %v874, %v946
      %v963 = vsel %vm931, %v877, %v947
      %v964 = vsel %vm932, %v882, %v948
      %v965 = vsel %vm933, %v885, %v949
      %v966 = vsel %vm934, %v890, %v950
      %v967 = vsel %vm935, %v893, %v951
      %v968 = vsel %vm936, %v898, %v952
      %v969 = vsel %vm937, %v901, %v953
      %v970 = vsel %vm938, %v906, %v954
      %v971 = vsel %vm939, %v909, %v955
      %v972 = vsel %vm940, %v914, %v956
      %v973 = vsel %vm941, %v917, %v957
      %v974 = vsel %vm942, %v922, %v958
      %v975 = vsel %vm943, %v925, %v959
      %vm976 = vcmask 64512
      %977 = vst.msk [vmem:[%s248] sm:$0xff] %vm976, %v960
      %978 = vst.msk [vmem:[%s248 + $0x8] sm:$0xff] %vm976, %v961
      %979 = vst.msk [vmem:[%s248 + $0x10] sm:$0xff] %vm976, %v962
      %980 = vst.msk [vmem:[%s248 + $0x18] sm:$0xff] %vm976, %v963
      %981 = vst.msk [vmem:[%s248 + $0x20] sm:$0xff] %vm976, %v964
      %982 = vst.msk [vmem:[%s248 + $0x28] sm:$0xff] %vm976, %v965
      %983 = vst.msk [vmem:[%s248 + $0x30] sm:$0xff] %vm976, %v966
      %984 = vst.msk [vmem:[%s248 + $0x38] sm:$0xff] %vm976, %v967
      %985 = vst.msk [vmem:[%s248 + $0x40] sm:$0xff] %vm976, %v968
      %986 = vst.msk [vmem:[%s248 + $0x48] sm:$0xff] %vm976, %v969
      %987 = vst.msk [vmem:[%s248 + $0x50] sm:$0xff] %vm976, %v970
      %988 = vst.msk [vmem:[%s248 + $0x58] sm:$0xff] %vm976, %v971
      %989 = vst.msk [vmem:[%s248 + $0x60] sm:$0xff] %vm976, %v972
      %990 = vst.msk [vmem:[%s248 + $0x68] sm:$0xff] %vm976, %v973
      %991 = vst.msk [vmem:[%s248 + $0x70] sm:$0xff] %vm976, %v974
      %992 = vst.msk [vmem:[%s248 + $0x78] sm:$0xff] %vm976, %v975
      %s993 = smul.u32 8, %s21
      %p994 = scmp.lt.s32.totalorder %s20, 1
      %s995 = scalar_select %p994, %s20, 1
      %p996 = scmp.lt.s32.totalorder %s993, 15
      %s997 = scalar_select %p996, %s993, 15
      %s998 = smul.addr %s997, 2
      %s999 = smul.addr %s995, 32
      %s1000 = sadd.s32 %s998, %s999
      %s1001 = smul.addr %s1000, 8
      %s1002 = scalar_lea.vmem %s5, %s1001
      // Predicated region
      $region41: #{conv_dw_forward.1} parent=39 // pred_check
        %p1003 = pneg %p158
      $region42: #{conv_dw_forward.1} parent=39 // pred_check_branch
        %1005 = sbr.rel (%p1003) target = $region44
      $region43: #{conv_dw_forward.1} parent=39 // pred_region
        %s1006 = smul.u32 8, %s21
      $region44: #{conv_dw_forward.1} parent=39 // pred_fallthru
        _
    $region40: #{conv_dw_forward.1} parent=5 // pred_fallthru
      _
    %p1007 = scmp.le.s32.totalorder 2, %s11
    // Predicated region
    $region45: #{conv_dw_forward.1} parent=5 // pred_check
      %p1008 = pneg %p1007
    $region46: #{conv_dw_forward.1} parent=5 // pred_check_branch
      %1010 = sbr.rel (%p1008) target = $region48
    $region47: #{conv_dw_forward.1} parent=5 // pred_region
      %s1011 = ssub.s32 %s11, 2
      // Predicated region
      $region49: #{conv_dw_forward.1} parent=47 // pred_check
        %p1012 = pneg %p164
      $region50: #{conv_dw_forward.1} parent=47 // pred_check_branch
        %1014 = sbr.rel (%p1012) target = $region52
      $region51: #{conv_dw_forward.1} parent=47 // pred_region
        %s1015 = smul.u32 8, %s23
        %p1016 = scmp.lt.s32.totalorder %s22, 1
        %s1017 = scalar_select %p1016, %s22, 1
        %p1018 = scmp.lt.s32.totalorder %s1015, 15
        %s1019 = scalar_select %p1018, %s1015, 15
        %s1020 = smul.addr %s1019, 2
        %s1021 = smul.addr %s1017, 32
        %s1022 = sadd.s32 %s1020, %s1021
        %s1023 = smul.addr %s1022, 8
        %s1024 = scalar_lea.vmem %s5, %s1023
      $region52: #{conv_dw_forward.1} parent=47 // pred_fallthru
        _
    $region48: #{conv_dw_forward.1} parent=5 // pred_fallthru
      _
  $region6: #{conv_dw_forward.1} parent=0 // loop_footer
    %s15 = sadd.s32 1, %s11
  $region7: #{conv_dw_forward.1} parent=0 // loop_footer_branch
    %10 = sbr.rel target = $region3
  $region8: #{conv_dw_forward.1} parent=0 // loop_exit
    _

</llo_original>
